<compile_context>
chip_gen: v6e
topology: v6e:2x2x1
jax: 0.10.0
libtpu: 0.0.40
codegen_flags: <defaults>
</compile_context>

<pallas_src>
from functools import partial
from typing import NamedTuple

import jax
import jax.numpy as jnp
from jax.experimental import pallas as pl
from jax.experimental.pallas import tpu as pltpu


def _round_up(n, m):
    return ((n + m - 1) // m) * m


def _vmem_capacity_bytes():
    try:
        return int(pltpu.get_tpu_info().vmem_capacity_bytes)
    except Exception:
        return 64 << 20          # conservative (v7x per-TC) fallback


class LambdaConfig(NamedTuple):
    num_clusters: int
    in_features: int
    out_features: int
    in_p: int
    out_p: int
    tile_in: int
    tile_out: int
    vmem_cap: int


def lambda_kernel(ra_ref, beta_ref, x_ref, tvw_ref, wavgw_ref, tvb_ref,
                  wavgb_ref, out_ref, acc_ref):
    i = pl.program_id(1)                       # IN (reduction) grid axis

    @pl.when(i == 0)
    def _():
        acc_ref[...] = jnp.zeros_like(acc_ref)

    # --- alphas(): softmax over the cluster axis (tiny: K lanes) ------------
    ra = ra_ref[...]                                           # (1, K) f32
    m = jnp.max(ra, axis=-1, keepdims=True)
    e = jnp.exp(ra - m)
    alphas = e / jnp.sum(e, axis=-1, keepdims=True)            # (1, K)

    # --- merge on the MXU: acc += x @ w_avg + sum_k alpha_k * (x @ tv_k) ----
    x = x_ref[...]                                             # (B_p, t_in) bf16
    acc = acc_ref[...]
    acc = acc + jnp.dot(x, wavgw_ref[...],
                        preferred_element_type=jnp.float32)    # (B_p, t_out)
    num_clusters = tvw_ref.shape[0]
    for k in range(num_clusters):                              # K small: static unroll
        ak = alphas[:, k:k + 1]                                # (1,1): no lane->scalar extraction
        acc = acc + ak * jnp.dot(x, tvw_ref[k],
                                 preferred_element_type=jnp.float32)
    acc_ref[...] = acc

    # --- finalize: merged bias + beta on the small output tile --------------
    @pl.when(i == pl.num_programs(1) - 1)
    def _():
        b = wavgb_ref[...].astype(jnp.float32)                 # (1, t_out)
        for k in range(num_clusters):
            b = b + alphas[:, k:k + 1] * tvb_ref[k]
        out_ref[...] = beta_ref[...] * (acc_ref[...] + b)


def prepare_lambda_weights(tv_w, w_avg_w, tv_b, w_avg_b):
    """One-time relayout of the fixed task vectors / average weights.

    tv_w (K, OUT, IN), w_avg_w (OUT, IN), tv_b (K, OUT), w_avg_b (OUT,)
    -> (cfg, (tvw (K, IN_p, OUT_p) bf16, wavgw (IN_p, OUT_p) bf16,
              tvb (K, 1, OUT_p) f32, wavgb (1, OUT_p) f32))
    """
    K, OUT, IN = tv_w.shape
    f32, bf16 = jnp.float32, jnp.bfloat16

    in_p0 = _round_up(max(IN, 128), 128)
    out_p0 = _round_up(max(OUT, 128), 128)

    # Generation-aware per-buffer budget for the streamed tv_w block
    # (~25 MiB on 128 MiB VMEM chips, ~12 MiB on v7x's 64 MiB).
    vmem_cap = _vmem_capacity_bytes()
    budget = max(4 << 20, vmem_cap // 5)

    tile_in = min(in_p0, max(128, (budget // (K * 128 * 2)) // 128 * 128))
    tile_out = min(out_p0, max(128, (budget // (K * tile_in * 2)) // 128 * 128))

    # No "tile must divide" constraint: pad up to tile multiples instead.
    in_p = _round_up(in_p0, tile_in)
    out_p = _round_up(out_p0, tile_out)

    tvw = jnp.transpose(tv_w.astype(f32), (0, 2, 1))           # (K, IN, OUT)
    tvw = jnp.pad(tvw, ((0, 0), (0, in_p - IN), (0, out_p - OUT))).astype(bf16)
    wavgw = jnp.pad(w_avg_w.astype(f32).T,
                    ((0, in_p - IN), (0, out_p - OUT))).astype(bf16)
    tvb = jnp.pad(tv_b.astype(f32).reshape(K, 1, OUT),
                  ((0, 0), (0, 0), (0, out_p - OUT)))
    wavgb = jnp.pad(w_avg_b.astype(f32).reshape(1, OUT),
                    ((0, 0), (0, out_p - OUT)))

    cfg = LambdaConfig(num_clusters=K, in_features=IN, out_features=OUT,
                       in_p=in_p, out_p=out_p,
                       tile_in=tile_in, tile_out=tile_out, vmem_cap=vmem_cap)
    return cfg, (tvw, wavgw, tvb, wavgb)


@partial(jax.jit, static_argnames=("cfg",))
def lambda_forward(cfg, raw_alphas, beta, x, tvw, wavgw, tvb, wavgb):
    """raw_alphas (K,), beta (1,), x (B, IN) + prepared weights -> (B, OUT) f32."""
    K = cfg.num_clusters
    B, IN = x.shape
    assert IN == cfg.in_features
    B_p = _round_up(max(B, 16), 16)            # bf16 min sublane tile = 16

    f32, bf16 = jnp.float32, jnp.bfloat16
    ra = raw_alphas.reshape(1, K).astype(f32)
    beta11 = beta.reshape(1, 1).astype(f32)
    x_p = jnp.pad(x.astype(f32),
                  ((0, B_p - B), (0, cfg.in_p - IN))).astype(bf16)

    grid = (cfg.out_p // cfg.tile_out, cfg.in_p // cfg.tile_in)

    # Explicit VMEM limit from actual (double-buffered) block bytes + headroom,
    # clamped to the chip's real capacity (not a hard-coded 64 MiB).
    blk_bytes = 2 * (K * cfg.tile_in * cfg.tile_out * 2        # tv_w block (bf16)
                     + cfg.tile_in * cfg.tile_out * 2          # w_avg block (bf16)
                     + B_p * cfg.tile_in * 2                   # x block (bf16)
                     + K * cfg.tile_out * 4                    # tv_b block
                     + cfg.tile_out * 4                        # w_avg_b block
                     + B_p * cfg.tile_out * 4)                 # out block
    vmem_limit = blk_bytes + B_p * cfg.tile_out * 4 + (4 << 20)
    vmem_limit = int(min(max(vmem_limit, 16 << 20), int(cfg.vmem_cap * 0.9)))

    out_p = pl.pallas_call(
        lambda_kernel,
        out_shape=jax.ShapeDtypeStruct((B_p, cfg.out_p), f32),
        grid=grid,
        in_specs=[
            pl.BlockSpec((1, K), lambda o, i: (0, 0)),                      # raw_alphas
            pl.BlockSpec((1, 1), lambda o, i: (0, 0)),                      # beta
            pl.BlockSpec((B_p, cfg.tile_in), lambda o, i: (0, i)),          # x tile
            pl.BlockSpec((K, cfg.tile_in, cfg.tile_out),
                         lambda o, i: (0, i, o)),                           # tv_w tile
            pl.BlockSpec((cfg.tile_in, cfg.tile_out), lambda o, i: (i, o)), # w_avg_w tile
            pl.BlockSpec((K, 1, cfg.tile_out), lambda o, i: (0, 0, o)),     # tv_b tile
            pl.BlockSpec((1, cfg.tile_out), lambda o, i: (0, o)),           # w_avg_b tile
        ],
        out_specs=pl.BlockSpec((B_p, cfg.tile_out), lambda o, i: (0, o)),
        scratch_shapes=[pltpu.VMEM((B_p, cfg.tile_out), jnp.float32)],
        compiler_params=pltpu.CompilerParams(
            dimension_semantics=("parallel", "arbitrary"),
            vmem_limit_bytes=vmem_limit),
    )(ra, beta11, x_p, tvw, wavgw, tvb, wavgb)

    return out_p[:B, :cfg.out_features]


if __name__ == "__main__":
    key = jax.random.PRNGKey(0)
    K, B, IN, OUT = 4, 8, 32, 16     # num_clusters, batch, in_features, out_features
    k1, k2, k3, k4, k5 = jax.random.split(key, 5)

    # Mirrors LambdaWrapper.__init__ with alpha_init=None (uniform softmax init):
    raw_alphas = jax.nn.softmax(jnp.ones((K,), jnp.float32))
    beta = jnp.ones((1,), jnp.float32)

    # w_avg / task_vectors for the Linear arch (names = ["weight", "bias"]).
    w_avg_w = jax.random.normal(k1, (OUT, IN), jnp.float32) * 0.1
    w_avg_b = jax.random.normal(k2, (OUT,), jnp.float32) * 0.1
    tv_w = jax.random.normal(k3, (K, OUT, IN), jnp.float32) * 0.05
    tv_b = jax.random.normal(k4, (K, OUT), jnp.float32) * 0.05
    x = jax.random.normal(k5, (B, IN), jnp.float32)

    # One-time relayout (fixed tensors), then the fused forward.
    cfg, packed = prepare_lambda_weights(tv_w, w_avg_w, tv_b, w_avg_b)
    out = lambda_forward(cfg, raw_alphas, beta, x, *packed)
    out = jax.block_until_ready(out)

    # Pure-JAX f32 reference of the same forward (sanity check).
    a = jax.nn.softmax(raw_alphas)
    W = (a[:, None, None] * tv_w).sum(0) + w_avg_w
    bb = (a[:, None] * tv_b).sum(0) + w_avg_b
    ref = beta * (x @ W.T + bb)
    assert out.shape == (B, OUT)
    # bf16 streamed weights + bf16 MXU operands -> loosened tolerance vs f32 ref.
    err = float(jnp.max(jnp.abs(out - ref)))
    assert jnp.allclose(out, ref, atol=5e-2, rtol=5e-2), err

    print("KERNEL_OK")
</pallas_src>

<mosaic_0001>
module attributes {stable_mosaic.version = 11 : i64} {
  func.func @lambda_kernel(%arg0: i32, %arg1: i32, %arg2: memref<1x4xf32, #tpu.memory_space<vmem>>, %arg3: memref<1x1xf32, #tpu.memory_space<vmem>>, %arg4: memref<16x128xbf16, #tpu.memory_space<vmem>>, %arg5: memref<4x128x128xbf16, #tpu.memory_space<vmem>>, %arg6: memref<128x128xbf16, #tpu.memory_space<vmem>>, %arg7: memref<4x1x128xf32, #tpu.memory_space<vmem>>, %arg8: memref<1x128xf32, #tpu.memory_space<vmem>>, %arg9: memref<16x128xf32, #tpu.memory_space<vmem>>, %arg10: memref<16x128xf32, #tpu.memory_space<vmem>>) attributes {dimension_semantics = [#tpu.dimension_semantics<parallel>, #tpu.dimension_semantics<arbitrary>], iteration_bounds = array<i64: 1, 1>, scalar_prefetch = 0 : i64, scratch_operands = 1 : i64, tpu.core_type = #tpu.core_type<tc>, window_params = [{pipeline_mode = #tpu.pipeline_mode<synchronous>, transform_indices = @transform_0, window_bounds = array<i64: 1, 4>}, {pipeline_mode = #tpu.pipeline_mode<synchronous>, transform_indices = @transform_1, window_bounds = array<i64: 1, 1>}, {transform_indices = @transform_2, window_bounds = array<i64: 16, 128>}, {transform_indices = @transform_3, window_bounds = array<i64: 4, 128, 128>}, {transform_indices = @transform_4, window_bounds = array<i64: 128, 128>}, {transform_indices = @transform_5, window_bounds = array<i64: 4, 1, 128>}, {transform_indices = @transform_6, window_bounds = array<i64: 1, 128>}, {transform_indices = @transform_7, window_bounds = array<i64: 16, 128>}]} {
    %c0_i32 = arith.constant 0 : i32
    %0 = arith.cmpi eq, %arg1, %c0_i32 : i32
    %1 = arith.extui %0 : i1 to i32
    %c0_i32_0 = arith.constant 0 : i32
    %2 = arith.cmpi ne, %1, %c0_i32_0 : i32
    scf.if %2 {
      %cst_27 = arith.constant 0.000000e+00 : f32
      %50 = vector.broadcast %cst_27 : f32 to vector<16x128xf32>
      %c0_28 = arith.constant 0 : index
      %c0_29 = arith.constant 0 : index
      %51 = vector.load %arg10[%c0_28, %c0_29] : memref<16x128xf32, #tpu.memory_space<vmem>>, vector<16x128xf32>
      tpu.vector_store %arg10[%c0_28, %c0_29], %50 {strides = array<i32>} : memref<16x128xf32, #tpu.memory_space<vmem>>, vector<16x128xf32>,
    } else {
    }
    %c0 = arith.constant 0 : index
    %c0_1 = arith.constant 0 : index
    %3 = vector.load %arg2[%c0, %c0_1] : memref<1x4xf32, #tpu.memory_space<vmem>>, vector<1x4xf32>
    %cst = arith.constant dense<0xFF800000> : vector<1xf32>
    %4 = vector.multi_reduction <maximumf>, %3, %cst [1] : vector<1x4xf32> to vector<1xf32>
    %5 = vector.shape_cast %4 : vector<1xf32> to vector<1x1xf32>
    %6 = vector.broadcast %5 : vector<1x1xf32> to vector<1x4xf32>
    %7 = arith.subf %3, %6 : vector<1x4xf32>
    %8 = math.exp %7 : vector<1x4xf32>
    %cst_2 = arith.constant dense<0.000000e+00> : vector<1xf32>
    %9 = vector.multi_reduction <add>, %8, %cst_2 [1] : vector<1x4xf32> to vector<1xf32>
    %10 = vector.shape_cast %9 : vector<1xf32> to vector<1x1xf32>
    %11 = vector.broadcast %10 : vector<1x1xf32> to vector<1x4xf32>
    %12 = arith.divf %8, %11 : vector<1x4xf32>
    %c0_3 = arith.constant 0 : index
    %c0_4 = arith.constant 0 : index
    %13 = vector.load %arg4[%c0_3, %c0_4] : memref<16x128xbf16, #tpu.memory_space<vmem>>, vector<16x128xbf16>
    %c0_5 = arith.constant 0 : index
    %c0_6 = arith.constant 0 : index
    %14 = vector.load %arg10[%c0_5, %c0_6] : memref<16x128xf32, #tpu.memory_space<vmem>>, vector<16x128xf32>
    %c0_7 = arith.constant 0 : index
    %c0_8 = arith.constant 0 : index
    %15 = vector.load %arg6[%c0_7, %c0_8] : memref<128x128xbf16, #tpu.memory_space<vmem>>, vector<128x128xbf16>
    %cst_9 = arith.constant dense<0.000000e+00> : vector<16x128xf32>
    %16 = tpu.matmul %13, %15, %cst_9 {dimension_numbers = #tpu.dot_dimension_numbers<[1], [0], [0], [1], [0, 0, 1, 1], [], []>} : vector<16x128xbf16>, vector<128x128xbf16>, vector<16x128xf32> -> vector<16x128xf32>
    %17 = arith.addf %14, %16 : vector<16x128xf32>
    %18 = vector.extract_strided_slice %12 {offsets = [0, 0], sizes = [1, 1], strides = [1, 1]} : vector<1x4xf32> to vector<1x1xf32>
    %c0_10 = arith.constant 0 : index
    %c0_11 = arith.constant 0 : index
    %c0_12 = arith.constant 0 : index
    %19 = vector.load %arg5[%c0_10, %c0_11, %c0_12] : memref<4x128x128xbf16, #tpu.memory_space<vmem>>, vector<1x128x128xbf16>
    %20 = vector.shape_cast %19 : vector<1x128x128xbf16> to vector<128x128xbf16>
    %cst_13 = arith.constant dense<0.000000e+00> : vector<16x128xf32>
    %21 = tpu.matmul %13, %20, %cst_13 {dimension_numbers = #tpu.dot_dimension_numbers<[1], [0], [0], [1], [0, 0, 1, 1], [], []>} : vector<16x128xbf16>, vector<128x128xbf16>, vector<16x128xf32> -> vector<16x128xf32>
    %22 = vector.broadcast %18 : vector<1x1xf32> to vector<16x128xf32>
    %23 = arith.mulf %22, %21 : vector<16x128xf32>
    %24 = arith.addf %17, %23 : vector<16x128xf32>
    %25 = vector.extract_strided_slice %12 {offsets = [0, 1], sizes = [1, 1], strides = [1, 1]} : vector<1x4xf32> to vector<1x1xf32>
    %c1 = arith.constant 1 : index
    %c0_14 = arith.constant 0 : index
    %c0_15 = arith.constant 0 : index
    %26 = vector.load %arg5[%c1, %c0_14, %c0_15] : memref<4x128x128xbf16, #tpu.memory_space<vmem>>, vector<1x128x128xbf16>
    %27 = vector.shape_cast %26 : vector<1x128x128xbf16> to vector<128x128xbf16>
    %cst_16 = arith.constant dense<0.000000e+00> : vector<16x128xf32>
    %28 = tpu.matmul %13, %27, %cst_16 {dimension_numbers = #tpu.dot_dimension_numbers<[1], [0], [0], [1], [0, 0, 1, 1], [], []>} : vector<16x128xbf16>, vector<128x128xbf16>, vector<16x128xf32> -> vector<16x128xf32>
    %29 = vector.broadcast %25 : vector<1x1xf32> to vector<16x128xf32>
    %30 = arith.mulf %29, %28 : vector<16x128xf32>
    %31 = arith.addf %24, %30 : vector<16x128xf32>
    %32 = vector.extract_strided_slice %12 {offsets = [0, 2], sizes = [1, 1], strides = [1, 1]} : vector<1x4xf32> to vector<1x1xf32>
    %c2 = arith.constant 2 : index
    %c0_17 = arith.constant 0 : index
    %c0_18 = arith.constant 0 : index
    %33 = vector.load %arg5[%c2, %c0_17, %c0_18] : memref<4x128x128xbf16, #tpu.memory_space<vmem>>, vector<1x128x128xbf16>
    %34 = vector.shape_cast %33 : vector<1x128x128xbf16> to vector<128x128xbf16>
    %cst_19 = arith.constant dense<0.000000e+00> : vector<16x128xf32>
    %35 = tpu.matmul %13, %34, %cst_19 {dimension_numbers = #tpu.dot_dimension_numbers<[1], [0], [0], [1], [0, 0, 1, 1], [], []>} : vector<16x128xbf16>, vector<128x128xbf16>, vector<16x128xf32> -> vector<16x128xf32>
    %36 = vector.broadcast %32 : vector<1x1xf32> to vector<16x128xf32>
    %37 = arith.mulf %36, %35 : vector<16x128xf32>
    %38 = arith.addf %31, %37 : vector<16x128xf32>
    %39 = vector.extract_strided_slice %12 {offsets = [0, 3], sizes = [1, 1], strides = [1, 1]} : vector<1x4xf32> to vector<1x1xf32>
    %c3 = arith.constant 3 : index
    %c0_20 = arith.constant 0 : index
    %c0_21 = arith.constant 0 : index
    %40 = vector.load %arg5[%c3, %c0_20, %c0_21] : memref<4x128x128xbf16, #tpu.memory_space<vmem>>, vector<1x128x128xbf16>
    %41 = vector.shape_cast %40 : vector<1x128x128xbf16> to vector<128x128xbf16>
    %cst_22 = arith.constant dense<0.000000e+00> : vector<16x128xf32>
    %42 = tpu.matmul %13, %41, %cst_22 {dimension_numbers = #tpu.dot_dimension_numbers<[1], [0], [0], [1], [0, 0, 1, 1], [], []>} : vector<16x128xbf16>, vector<128x128xbf16>, vector<16x128xf32> -> vector<16x128xf32>
    %43 = vector.broadcast %39 : vector<1x1xf32> to vector<16x128xf32>
    %44 = arith.mulf %43, %42 : vector<16x128xf32>
    %45 = arith.addf %38, %44 : vector<16x128xf32>
    %c0_23 = arith.constant 0 : index
    %c0_24 = arith.constant 0 : index
    %46 = vector.load %arg10[%c0_23, %c0_24] : memref<16x128xf32, #tpu.memory_space<vmem>>, vector<16x128xf32>
    tpu.vector_store %arg10[%c0_23, %c0_24], %45 {strides = array<i32>} : memref<16x128xf32, #tpu.memory_space<vmem>>, vector<16x128xf32>,
    %c0_i32_25 = arith.constant 0 : i32
    %47 = arith.cmpi eq, %arg1, %c0_i32_25 : i32
    %48 = arith.extui %47 : i1 to i32
    %c0_i32_26 = arith.constant 0 : i32
    %49 = arith.cmpi ne, %48, %c0_i32_26 : i32
    scf.if %49 {
      %c0_27 = arith.constant 0 : index
      %c0_28 = arith.constant 0 : index
      %50 = vector.load %arg8[%c0_27, %c0_28] : memref<1x128xf32, #tpu.memory_space<vmem>>, vector<1x128xf32>
      %51 = vector.extract_strided_slice %12 {offsets = [0, 0], sizes = [1, 1], strides = [1, 1]} : vector<1x4xf32> to vector<1x1xf32>
      %c0_29 = arith.constant 0 : index
      %c0_30 = arith.constant 0 : index
      %c0_31 = arith.constant 0 : index
      %52 = vector.load %arg7[%c0_29, %c0_30, %c0_31] : memref<4x1x128xf32, #tpu.memory_space<vmem>>, vector<1x1x128xf32>
      %53 = vector.shape_cast %52 : vector<1x1x128xf32> to vector<1x128xf32>
      %54 = vector.broadcast %51 : vector<1x1xf32> to vector<1x128xf32>
      %55 = arith.mulf %54, %53 : vector<1x128xf32>
      %56 = arith.addf %50, %55 : vector<1x128xf32>
      %57 = vector.extract_strided_slice %12 {offsets = [0, 1], sizes = [1, 1], strides = [1, 1]} : vector<1x4xf32> to vector<1x1xf32>
      %c1_32 = arith.constant 1 : index
      %c0_33 = arith.constant 0 : index
      %c0_34 = arith.constant 0 : index
      %58 = vector.load %arg7[%c1_32, %c0_33, %c0_34] : memref<4x1x128xf32, #tpu.memory_space<vmem>>, vector<1x1x128xf32>
      %59 = vector.shape_cast %58 : vector<1x1x128xf32> to vector<1x128xf32>
      %60 = vector.broadcast %57 : vector<1x1xf32> to vector<1x128xf32>
      %61 = arith.mulf %60, %59 : vector<1x128xf32>
      %62 = arith.addf %56, %61 : vector<1x128xf32>
      %63 = vector.extract_strided_slice %12 {offsets = [0, 2], sizes = [1, 1], strides = [1, 1]} : vector<1x4xf32> to vector<1x1xf32>
      %c2_35 = arith.constant 2 : index
      %c0_36 = arith.constant 0 : index
      %c0_37 = arith.constant 0 : index
      %64 = vector.load %arg7[%c2_35, %c0_36, %c0_37] : memref<4x1x128xf32, #tpu.memory_space<vmem>>, vector<1x1x128xf32>
      %65 = vector.shape_cast %64 : vector<1x1x128xf32> to vector<1x128xf32>
      %66 = vector.broadcast %63 : vector<1x1xf32> to vector<1x128xf32>
      %67 = arith.mulf %66, %65 : vector<1x128xf32>
      %68 = arith.addf %62, %67 : vector<1x128xf32>
      %69 = vector.extract_strided_slice %12 {offsets = [0, 3], sizes = [1, 1], strides = [1, 1]} : vector<1x4xf32> to vector<1x1xf32>
      %c3_38 = arith.constant 3 : index
      %c0_39 = arith.constant 0 : index
      %c0_40 = arith.constant 0 : index
      %70 = vector.load %arg7[%c3_38, %c0_39, %c0_40] : memref<4x1x128xf32, #tpu.memory_space<vmem>>, vector<1x1x128xf32>
      %71 = vector.shape_cast %70 : vector<1x1x128xf32> to vector<1x128xf32>
      %72 = vector.broadcast %69 : vector<1x1xf32> to vector<1x128xf32>
      %73 = arith.mulf %72, %71 : vector<1x128xf32>
      %74 = arith.addf %68, %73 : vector<1x128xf32>
      %c0_41 = arith.constant 0 : index
      %c0_42 = arith.constant 0 : index
      %75 = vector.load %arg3[%c0_41, %c0_42] : memref<1x1xf32, #tpu.memory_space<vmem>>, vector<1x1xf32>
      %c0_43 = arith.constant 0 : index
      %c0_44 = arith.constant 0 : index
      %76 = vector.load %arg10[%c0_43, %c0_44] : memref<16x128xf32, #tpu.memory_space<vmem>>, vector<16x128xf32>
      %77 = vector.broadcast %74 : vector<1x128xf32> to vector<16x128xf32>
      %78 = arith.addf %76, %77 : vector<16x128xf32>
      %79 = vector.broadcast %75 : vector<1x1xf32> to vector<16x128xf32>
      %80 = arith.mulf %79, %78 : vector<16x128xf32>
      %c0_45 = arith.constant 0 : index
      %c0_46 = arith.constant 0 : index
      %81 = vector.load %arg9[%c0_45, %c0_46] : memref<16x128xf32, #tpu.memory_space<vmem>>, vector<16x128xf32>
      tpu.vector_store %arg9[%c0_45, %c0_46], %80 {strides = array<i32>} : memref<16x128xf32, #tpu.memory_space<vmem>>, vector<16x128xf32>,
    } else {
    }
    return
  }
  func.func @transform_0(%arg0: i32, %arg1: i32) -> (i32, i32) {
    %c0_i32 = arith.constant 0 : i32
    %c0_i32_0 = arith.constant 0 : i32
    %c0_i32_1 = arith.constant 0 : i32
    return %c0_i32, %c0_i32_0 : i32, i32
  }
  func.func @transform_1(%arg0: i32, %arg1: i32) -> (i32, i32) {
    %c0_i32 = arith.constant 0 : i32
    %c0_i32_0 = arith.constant 0 : i32
    %c0_i32_1 = arith.constant 0 : i32
    return %c0_i32, %c0_i32_0 : i32, i32
  }
  func.func @transform_2(%arg0: i32, %arg1: i32) -> (i32, i32) {
    %c0_i32 = arith.constant 0 : i32
    %c0_i32_0 = arith.constant 0 : i32
    return %c0_i32, %arg1 : i32, i32
  }
  func.func @transform_3(%arg0: i32, %arg1: i32) -> (i32, i32, i32) {
    %c0_i32 = arith.constant 0 : i32
    %c0_i32_0 = arith.constant 0 : i32
    return %c0_i32, %arg1, %arg0 : i32, i32, i32
  }
  func.func @transform_4(%arg0: i32, %arg1: i32) -> (i32, i32) {
    %c0_i32 = arith.constant 0 : i32
    return %arg1, %arg0 : i32, i32
  }
  func.func @transform_5(%arg0: i32, %arg1: i32) -> (i32, i32, i32) {
    %c0_i32 = arith.constant 0 : i32
    %c0_i32_0 = arith.constant 0 : i32
    %c0_i32_1 = arith.constant 0 : i32
    return %c0_i32, %c0_i32_0, %arg0 : i32, i32, i32
  }
  func.func @transform_6(%arg0: i32, %arg1: i32) -> (i32, i32) {
    %c0_i32 = arith.constant 0 : i32
    %c0_i32_0 = arith.constant 0 : i32
    return %c0_i32, %arg0 : i32, i32
  }
  func.func @transform_7(%arg0: i32, %arg1: i32) -> (i32, i32) {
    %c0_i32 = arith.constant 0 : i32
    %c0_i32_0 = arith.constant 0 : i32
    return %c0_i32, %arg0 : i32, i32
  }
}

</mosaic_0001>

<llo_original>
// kernel: lambda_forward.1
$region0: #{lambda_forward.1}
  #allocation0 [shape = 'u32[]', space=smem, size = 0x4, offset = 0x4, fixed_abs, tag = 'smem constant byte address 0x4 - core index']
  #allocation1 [shape = 'u32[144,128]{1,0:T(1,128)}', space=vmem, size = 0x12000, scoped, tag = 'internal scratch']
  #allocation2 [shape = 'f32[16,128]{1,0:T(8,128)}', space=vmem, size = 0x2000, scoped, tag = 'scratch operand']
  #allocation3 [shape = 'f32[1,1]{1,0:T(1,128)S(1)}', space=vmem, size = 0x200, scoped, tag = 'scoped memory for lambda_forward.1']
  %s0 = inlined_call_operand.vmem [shape: f32[1,4], index: 0, kind: input, shape index: {}]
  %s1 = inlined_call_operand.<no memory space> [shape: f32[1,1], index: 1, kind: input, shape index: {}]
  %s2 = inlined_call_operand.vmem [shape: bf16[16,128], index: 2, kind: input, shape index: {}]
  %s3 = inlined_call_operand.hbm [shape: bf16[4,128,128], index: 3, kind: input, shape index: {}]
  %s4 = inlined_call_operand.hbm [shape: bf16[128,128], index: 4, kind: input, shape index: {}]
  %s5 = inlined_call_operand.vmem [shape: f32[4,1,128], index: 5, kind: input, shape index: {}]
  %s6 = inlined_call_operand.vmem [shape: f32[1,128], index: 6, kind: input, shape index: {}]
  %s7 = inlined_call_operand.vmem [shape: f32[16,128], index: 7, kind: output, shape index: {}]
  %s8 = sld [smem:[#allocation0]]
  $region54: #{lambda_forward.1} parent=0
    _
  %s10 = ssub.s32 1, %s8
  %s11 = scalar_select 0, %s10, %s8
  %v12 = vstv %s1
  %13 = vst [vmem:[#allocation3] sm:$0x1] %v12
  $region1: #{lambda_forward.1} parent=0
    #allocation4 [shape = 'u8[131072]{0}', space=vmem, size = 0x20000, scoped, tag = 'input window, operand 3, single buffered']
    #allocation5 [shape = 's32[1]{0}', space=sflag, size = 0x4, scoped, tag = 'scoped memory for lambda_forward.1']
    #allocation6 [shape = 'u8[32768]{0}', space=vmem, size = 0x8000, scoped, tag = 'input window, operand 4, single buffered']
    #allocation7 [shape = 's32[1]{0}', space=sflag, size = 0x4, scoped, tag = 'scoped memory for lambda_forward.1']
    %14 = vsyncpa [#allocation5], 0
    %15 = vsyncpa [#allocation7], 0
    // Predicated region
    $region2: #{lambda_forward.1} parent=1 // pred_check
      _
    $region3: #{lambda_forward.1} parent=1 // pred_check_branch
      %17 = sbr.rel (0) target = $region5
    $region4: #{lambda_forward.1} parent=1 // pred_region
      _
    $region5: #{lambda_forward.1} parent=1 // pred_fallthru
      _
    // Predicated region
    $region6: #{lambda_forward.1} parent=1 // pred_check
      _
    $region7: #{lambda_forward.1} parent=1 // pred_check_branch
      %19 = sbr.rel (0) target = $region9
    $region8: #{lambda_forward.1} parent=1 // pred_region
      _
    $region9: #{lambda_forward.1} parent=1 // pred_fallthru
      _
    // Predicated region
    $region10: #{lambda_forward.1} parent=1 // pred_check
      _
    $region11: #{lambda_forward.1} parent=1 // pred_check_branch
      %21 = sbr.rel (0) target = $region13
    $region12: #{lambda_forward.1} parent=1 // pred_region
      _
    $region13: #{lambda_forward.1} parent=1 // pred_fallthru
      _
    // Predicated region
    $region14: #{lambda_forward.1} parent=1 // pred_check
      _
    $region15: #{lambda_forward.1} parent=1 // pred_check_branch
      %23 = sbr.rel (0) target = $region17
    $region16: #{lambda_forward.1} parent=1 // pred_region
      %s25 = ssub.s32 4096, 4096
      %26 = vsyncadd [#allocation5], %s25
      %s27 = sshll.u32 [#allocation4], 4
      %s28 = int_to_ptr.vmem [resolvable:$true] %s27
      %33 = dma.hbm_to_vmem [thread:$0]  %s3, 4096, %s28, [#allocation5], 64, 64, 4
    $region17: #{lambda_forward.1} parent=1 // pred_fallthru
      _
    // Predicated region
    $region18: #{lambda_forward.1} parent=1 // pred_check
      _
    $region19: #{lambda_forward.1} parent=1 // pred_check_branch
      %35 = sbr.rel (0) target = $region21
    $region20: #{lambda_forward.1} parent=1 // pred_region
      %s37 = ssub.s32 1024, 1024
      %38 = vsyncadd [#allocation7], %s37
      %s39 = sshll.u32 [#allocation6], 4
      %s40 = int_to_ptr.vmem [resolvable:$true] %s39
      %45 = dma.hbm_to_vmem [thread:$0]  %s4, 1024, %s40, [#allocation7], 64, 64, 4
    $region21: #{lambda_forward.1} parent=1 // pred_fallthru
      _
    // Predicated region
    $region22: #{lambda_forward.1} parent=1 // pred_check
      _
    $region23: #{lambda_forward.1} parent=1 // pred_check_branch
      %47 = sbr.rel (0) target = $region25
    $region24: #{lambda_forward.1} parent=1 // pred_region
      _
    $region25: #{lambda_forward.1} parent=1 // pred_fallthru
      _
    // Predicated region
    $region26: #{lambda_forward.1} parent=1 // pred_check
      _
    $region27: #{lambda_forward.1} parent=1 // pred_check_branch
      %49 = sbr.rel (0) target = $region29
    $region28: #{lambda_forward.1} parent=1 // pred_region
      _
    $region29: #{lambda_forward.1} parent=1 // pred_fallthru
      _
    // Predicated region
    $region30: #{lambda_forward.1} parent=1 // pred_check
      _
    $region31: #{lambda_forward.1} parent=1 // pred_check_branch
      %51 = sbr.rel (0) target = $region33
    $region32: #{lambda_forward.1} parent=1 // pred_region
      %52 = dma.done [#allocation5], 4096
    $region33: #{lambda_forward.1} parent=1 // pred_fallthru
      _
    // Predicated region
    $region34: #{lambda_forward.1} parent=1 // pred_check
      _
    $region35: #{lambda_forward.1} parent=1 // pred_check_branch
      %54 = sbr.rel (0) target = $region37
    $region36: #{lambda_forward.1} parent=1 // pred_region
      %55 = dma.done [#allocation7], 1024
    $region37: #{lambda_forward.1} parent=1 // pred_fallthru
      _
    %p57 = scmp.eq.s32.totalorder 0, 0
    // Predicated region
    $region38: #{lambda_forward.1} parent=1 // pred_check
      %p58 = pneg %p57
    $region39: #{lambda_forward.1} parent=1 // pred_check_branch
      %60 = sbr.rel (%p58) target = $region41
    $region40: #{lambda_forward.1} parent=1 // pred_region
      %61 = vst [vmem:[#allocation2] sm:$0xff] 0.0
      %62 = vst [vmem:[#allocation2 + $0x8] sm:$0xff] 0.0
    $region41: #{lambda_forward.1} parent=1 // pred_fallthru
      _
    %v63 = vld [vmem:[%s0] sm:$0x1]
    %vm64 = vcmask 24576
    %v65 = vsel %vm64, %v63, -inf
    %66 = vmax.xlane.f32.xlu0 %v65
    %v67 = vpop.xlane.xlu0 %66
    %v68 = vsub.f32 %v63, %v67
    %v69 = vmul.f32 %v68, 1.442695
    %v70 = vpow.pop %v69
    %v71 = vsel %vm64, %v70, 0.0
    %72 = vadd.xlane.f32.xlu0 %v71
    %v73 = vpop.xlane.xlu0 %72
    %v74 = vrcp.pop %v73
    %v75 = vmul.f32 %v70, %v74
    %v76 = vld [vmem:[%s2] sm:$0xf]
    %v77 = vld [vmem:[%s2 + $0x4] sm:$0xf]
    %v78 = vld [vmem:[#allocation2] sm:$0xff]
    %v79 = vld [vmem:[#allocation2 + $0x8] sm:$0xff]
    %v80 = vld [vmem:[#allocation6] sm:$0xf]
    %v81 = vld [vmem:[#allocation6 + $0x4] sm:$0xf]
    %v82 = vld [vmem:[#allocation6 + $0x8] sm:$0xf]
    %v83 = vld [vmem:[#allocation6 + $0xc] sm:$0xf]
    %v84 = vld [vmem:[#allocation6 + $0x10] sm:$0xf]
    %v85 = vld [vmem:[#allocation6 + $0x14] sm:$0xf]
    %v86 = vld [vmem:[#allocation6 + $0x18] sm:$0xf]
    %v87 = vld [vmem:[#allocation6 + $0x1c] sm:$0xf]
    %v88 = vld [vmem:[#allocation6 + $0x20] sm:$0xf]
    %v89 = vld [vmem:[#allocation6 + $0x24] sm:$0xf]
    %v90 = vld [vmem:[#allocation6 + $0x28] sm:$0xf]
    %v91 = vld [vmem:[#allocation6 + $0x2c] sm:$0xf]
    %v92 = vld [vmem:[#allocation6 + $0x30] sm:$0xf]
    %v93 = vld [vmem:[#allocation6 + $0x34] sm:$0xf]
    %v94 = vld [vmem:[#allocation6 + $0x38] sm:$0xf]
    %v95 = vld [vmem:[#allocation6 + $0x3c] sm:$0xf]
    %v98 = vunpack.c.l.b16 %v76
    %v99 = vunpack.c.l.b16 %v77
    %v100 = vpack.c.b16 %v99, %v98
    %v118 = vunpack.c.l.b16 %v80
    %v119 = vunpack.c.l.b16 %v81
    %v120 = vunpack.c.l.b16 %v82
    %v121 = vunpack.c.l.b16 %v83
    %v122 = vunpack.c.l.b16 %v84
    %v123 = vunpack.c.l.b16 %v85
    %v124 = vunpack.c.l.b16 %v86
    %v125 = vunpack.c.l.b16 %v87
    %v126 = vunpack.c.l.b16 %v88
    %v127 = vunpack.c.l.b16 %v89
    %v128 = vunpack.c.l.b16 %v90
    %v129 = vunpack.c.l.b16 %v91
    %v130 = vunpack.c.l.b16 %v92
    %v131 = vunpack.c.l.b16 %v93
    %v132 = vunpack.c.l.b16 %v94
    %v133 = vunpack.c.l.b16 %v95
    %v134 = vpack.c.b16 %v119, %v118
    %v135 = vpack.c.b16 %v121, %v120
    %v136 = vpack.c.b16 %v123, %v122
    %v137 = vpack.c.b16 %v125, %v124
    %v138 = vpack.c.b16 %v127, %v126
    %v139 = vpack.c.b16 %v129, %v128
    %v140 = vpack.c.b16 %v131, %v130
    %v141 = vpack.c.b16 %v133, %v132
    %150 = vmatprep.subr.bf16.mxu0 0
    %151 = vmatpush1.bf16.msra.mxu0 %v141
    %152 = vmatprep.subr.bf16.mxu0 0
    %153 = vmatpush1.bf16.msra.mxu0 %v140
    %154 = vmatprep.subr.bf16.mxu0 0
    %155 = vmatpush1.bf16.msra.mxu0 %v139
    %156 = vmatprep.subr.bf16.mxu0 0
    %157 = vmatpush1.bf16.msra.mxu0 %v138
    %158 = vmatprep.subr.bf16.mxu0 0
    %159 = vmatpush1.bf16.msra.mxu0 %v137
    %160 = vmatprep.subr.bf16.mxu0 0
    %161 = vmatpush1.bf16.msra.mxu0 %v136
    %162 = vmatprep.subr.bf16.mxu0 0
    %163 = vmatpush1.bf16.msra.mxu0 %v135
    %164 = vmatprep.subr.bf16.mxu0 0
    %165 = vmatpush1.bf16.msra.mxu0 %v134
    %166 = vmatprep.subr.bf16.mxu0 0
    %167 = vmatpush2.bf16.msra.mxu0 0
    %168 = vmatprep.subr.bf16.mxu0 0
    %169 = vmatpush2.bf16.msra.mxu0 0
    %170 = vmatprep.subr.bf16.mxu0 0
    %171 = vmatpush2.bf16.msra.mxu0 0
    %172 = vmatprep.subr.bf16.mxu0 0
    %173 = vmatpush2.bf16.msra.mxu0 0
    %174 = vmatprep.subr.bf16.mxu0 0
    %175 = vmatpush2.bf16.msra.mxu0 0
    %176 = vmatprep.subr.bf16.mxu0 0
    %177 = vmatpush2.bf16.msra.mxu0 0
    %178 = vmatprep.subr.bf16.mxu0 0
    %179 = vmatpush2.bf16.msra.mxu0 0
    %180 = vmatprep.subr.bf16.mxu0 0
    %181 = vmatpush2.bf16.msra.mxu0 0
    %182 = vmatprep.mubr.bf16.mxu0 0
    %183 = vmatmul.mubr.bf16.gmra.mxu0 %v100
    %v184 = vpop.f32.mrf.mxu0
    %v185 = vadd.f32 0.0, %v184
    %v186 = vpop.f32.mrf.mxu0
    %v187 = vpop.f32.mrf.mxu0
    %v188 = vadd.f32 0.0, %v187
    %v189 = vpop.f32.mrf.mxu0
    %190 = vdwg.mxu0
    %v191 = vadd.f32 %v78, %v185
    %v192 = vadd.f32 %v79, %v188
    %v193 = vld [vmem:[#allocation4] sm:$0xf]
    %v194 = vld [vmem:[#allocation4 + $0x4] sm:$0xf]
    %v195 = vld [vmem:[#allocation4 + $0x8] sm:$0xf]
    %v196 = vld [vmem:[#allocation4 + $0xc] sm:$0xf]
    %v197 = vld [vmem:[#allocation4 + $0x10] sm:$0xf]
    %v198 = vld [vmem:[#allocation4 + $0x14] sm:$0xf]
    %v199 = vld [vmem:[#allocation4 + $0x18] sm:$0xf]
    %v200 = vld [vmem:[#allocation4 + $0x1c] sm:$0xf]
    %v201 = vld [vmem:[#allocation4 + $0x20] sm:$0xf]
    %v202 = vld [vmem:[#allocation4 + $0x24] sm:$0xf]
    %v203 = vld [vmem:[#allocation4 + $0x28] sm:$0xf]
    %v204 = vld [vmem:[#allocation4 + $0x2c] sm:$0xf]
    %v205 = vld [vmem:[#allocation4 + $0x30] sm:$0xf]
    %v206 = vld [vmem:[#allocation4 + $0x34] sm:$0xf]
    %v207 = vld [vmem:[#allocation4 + $0x38] sm:$0xf]
    %v208 = vld [vmem:[#allocation4 + $0x3c] sm:$0xf]
    %v225 = vunpack.c.l.b16 %v193
    %v226 = vunpack.c.l.b16 %v194
    %v227 = vunpack.c.l.b16 %v195
    %v228 = vunpack.c.l.b16 %v196
    %v229 = vunpack.c.l.b16 %v197
    %v230 = vunpack.c.l.b16 %v198
    %v231 = vunpack.c.l.b16 %v199
    %v232 = vunpack.c.l.b16 %v200
    %v233 = vunpack.c.l.b16 %v201
    %v234 = vunpack.c.l.b16 %v202
    %v235 = vunpack.c.l.b16 %v203
    %v236 = vunpack.c.l.b16 %v204
    %v237 = vunpack.c.l.b16 %v205
    %v238 = vunpack.c.l.b16 %v206
    %v239 = vunpack.c.l.b16 %v207
    %v240 = vunpack.c.l.b16 %v208
    %v241 = vpack.c.b16 %v226, %v225
    %v242 = vpack.c.b16 %v228, %v227
    %v243 = vpack.c.b16 %v230, %v229
    %v244 = vpack.c.b16 %v232, %v231
    %v245 = vpack.c.b16 %v234, %v233
    %v246 = vpack.c.b16 %v236, %v235
    %v247 = vpack.c.b16 %v238, %v237
    %v248 = vpack.c.b16 %v240, %v239
    %257 = vmatprep.subr.bf16.mxu0 0
    %258 = vmatpush1.bf16.msra.mxu0 %v248
    %259 = vmatprep.subr.bf16.mxu0 0
    %260 = vmatpush1.bf16.msra.mxu0 %v247
    %261 = vmatprep.subr.bf16.mxu0 0
    %262 = vmatpush1.bf16.msra.mxu0 %v246
    %263 = vmatprep.subr.bf16.mxu0 0
    %264 = vmatpush1.bf16.msra.mxu0 %v245
    %265 = vmatprep.subr.bf16.mxu0 0
    %266 = vmatpush1.bf16.msra.mxu0 %v244
    %267 = vmatprep.subr.bf16.mxu0 0
    %268 = vmatpush1.bf16.msra.mxu0 %v243
    %269 = vmatprep.subr.bf16.mxu0 0
    %270 = vmatpush1.bf16.msra.mxu0 %v242
    %271 = vmatprep.subr.bf16.mxu0 0
    %272 = vmatpush1.bf16.msra.mxu0 %v241
    %273 = vmatprep.subr.bf16.mxu0 0
    %274 = vmatpush2.bf16.msra.mxu0 0
    %275 = vmatprep.subr.bf16.mxu0 0
    %276 = vmatpush2.bf16.msra.mxu0 0
    %277 = vmatprep.subr.bf16.mxu0 0
    %278 = vmatpush2.bf16.msra.mxu0 0
    %279 = vmatprep.subr.bf16.mxu0 0
    %280 = vmatpush2.bf16.msra.mxu0 0
    %281 = vmatprep.subr.bf16.mxu0 0
    %282 = vmatpush2.bf16.msra.mxu0 0
    %283 = vmatprep.subr.bf16.mxu0 0
    %284 = vmatpush2.bf16.msra.mxu0 0
    %285 = vmatprep.subr.bf16.mxu0 0
    %286 = vmatpush2.bf16.msra.mxu0 0
    %287 = vmatprep.subr.bf16.mxu0 0
    %288 = vmatpush2.bf16.msra.mxu0 0
    %289 = vmatprep.mubr.bf16.mxu0 0
    %290 = vmatmul.mubr.bf16.gmra.mxu0 %v100
    %v291 = vpop.f32.mrf.mxu0
    %v292 = vadd.f32 0.0, %v291
    %v293 = vpop.f32.mrf.mxu0
    %v294 = vpop.f32.mrf.mxu0
    %v295 = vadd.f32 0.0, %v294
    %v296 = vpop.f32.mrf.mxu0
    %297 = vdwg.mxu0
    %v299 = vlaneseq
    %v300 = vshrl.u32 %v299, 7
    %v301 = vsub.s32 0, %v300
    %v302 = vrot.slane %v75, %v301
    %303 = vset.pattern.permute.xlu0 0
    %304 = vperm.xlu0 %303, %v302
    %v305 = vpop.permute.xlu0 %304
    %v307 = vmul.f32 %v305, %v292
    %v308 = vmul.f32 %v305, %v295
    %v309 = vadd.f32 %v191, %v307
    %v310 = vadd.f32 %v192, %v308
    %s311 = scalar_lea.vmem [#allocation4], 64
    %v312 = vld [vmem:[%s311] sm:$0xf]
    %v313 = vld [vmem:[%s311 + $0x4] sm:$0xf]
    %v314 = vld [vmem:[%s311 + $0x8] sm:$0xf]
    %v315 = vld [vmem:[%s311 + $0xc] sm:$0xf]
    %v316 = vld [vmem:[%s311 + $0x10] sm:$0xf]
    %v317 = vld [vmem:[%s311 + $0x14] sm:$0xf]
    %v318 = vld [vmem:[%s311 + $0x18] sm:$0xf]
    %v319 = vld [vmem:[%s311 + $0x1c] sm:$0xf]
    %v320 = vld [vmem:[%s311 + $0x20] sm:$0xf]
    %v321 = vld [vmem:[%s311 + $0x24] sm:$0xf]
    %v322 = vld [vmem:[%s311 + $0x28] sm:$0xf]
    %v323 = vld [vmem:[%s311 + $0x2c] sm:$0xf]
    %v324 = vld [vmem:[%s311 + $0x30] sm:$0xf]
    %v325 = vld [vmem:[%s311 + $0x34] sm:$0xf]
    %v326 = vld [vmem:[%s311 + $0x38] sm:$0xf]
    %v327 = vld [vmem:[%s311 + $0x3c] sm:$0xf]
    %v344 = vunpack.c.l.b16 %v312
    %v345 = vunpack.c.l.b16 %v313
    %v346 = vunpack.c.l.b16 %v314
    %v347 = vunpack.c.l.b16 %v315
    %v348 = vunpack.c.l.b16 %v316
    %v349 = vunpack.c.l.b16 %v317
    %v350 = vunpack.c.l.b16 %v318
    %v351 = vunpack.c.l.b16 %v319
    %v352 = vunpack.c.l.b16 %v320
    %v353 = vunpack.c.l.b16 %v321
    %v354 = vunpack.c.l.b16 %v322
    %v355 = vunpack.c.l.b16 %v323
    %v356 = vunpack.c.l.b16 %v324
    %v357 = vunpack.c.l.b16 %v325
    %v358 = vunpack.c.l.b16 %v326
    %v359 = vunpack.c.l.b16 %v327
    %v360 = vpack.c.b16 %v345, %v344
    %v361 = vpack.c.b16 %v347, %v346
    %v362 = vpack.c.b16 %v349, %v348
    %v363 = vpack.c.b16 %v351, %v350
    %v364 = vpack.c.b16 %v353, %v352
    %v365 = vpack.c.b16 %v355, %v354
    %v366 = vpack.c.b16 %v357, %v356
    %v367 = vpack.c.b16 %v359, %v358
    %376 = vmatprep.subr.bf16.mxu0 0
    %377 = vmatpush1.bf16.msra.mxu0 %v367
    %378 = vmatprep.subr.bf16.mxu0 0
    %379 = vmatpush1.bf16.msra.mxu0 %v366
    %380 = vmatprep.subr.bf16.mxu0 0
    %381 = vmatpush1.bf16.msra.mxu0 %v365
    %382 = vmatprep.subr.bf16.mxu0 0
    %383 = vmatpush1.bf16.msra.mxu0 %v364
    %384 = vmatprep.subr.bf16.mxu0 0
    %385 = vmatpush1.bf16.msra.mxu0 %v363
    %386 = vmatprep.subr.bf16.mxu0 0
    %387 = vmatpush1.bf16.msra.mxu0 %v362
    %388 = vmatprep.subr.bf16.mxu0 0
    %389 = vmatpush1.bf16.msra.mxu0 %v361
    %390 = vmatprep.subr.bf16.mxu0 0
    %391 = vmatpush1.bf16.msra.mxu0 %v360
    %392 = vmatprep.subr.bf16.mxu0 0
    %393 = vmatpush2.bf16.msra.mxu0 0
    %394 = vmatprep.subr.bf16.mxu0 0
    %395 = vmatpush2.bf16.msra.mxu0 0
    %396 = vmatprep.subr.bf16.mxu0 0
    %397 = vmatpush2.bf16.msra.mxu0 0
    %398 = vmatprep.subr.bf16.mxu0 0
    %399 = vmatpush2.bf16.msra.mxu0 0
    %400 = vmatprep.subr.bf16.mxu0 0
    %401 = vmatpush2.bf16.msra.mxu0 0
    %402 = vmatprep.subr.bf16.mxu0 0
    %403 = vmatpush2.bf16.msra.mxu0 0
    %404 = vmatprep.subr.bf16.mxu0 0
    %405 = vmatpush2.bf16.msra.mxu0 0
    %406 = vmatprep.subr.bf16.mxu0 0
    %407 = vmatpush2.bf16.msra.mxu0 0
    %408 = vmatprep.mubr.bf16.mxu0 0
    %409 = vmatmul.mubr.bf16.gmra.mxu0 %v100
    %v410 = vpop.f32.mrf.mxu0
    %v411 = vadd.f32 0.0, %v410
    %v412 = vpop.f32.mrf.mxu0
    %v413 = vpop.f32.mrf.mxu0
    %v414 = vadd.f32 0.0, %v413
    %v415 = vpop.f32.mrf.mxu0
    %416 = vdwg.mxu0
    %417 = vset.pattern.permute.xlu0 1
    %418 = vperm.xlu0 %417, %v302
    %v419 = vpop.permute.xlu0 %418
    %v421 = vmul.f32 %v419, %v411
    %v422 = vmul.f32 %v419, %v414
    %v423 = vadd.f32 %v309, %v421
    %v424 = vadd.f32 %v310, %v422
    %s425 = scalar_lea.vmem [#allocation4], 128
    %v426 = vld [vmem:[%s425] sm:$0xf]
    %v427 = vld [vmem:[%s425 + $0x4] sm:$0xf]
    %v428 = vld [vmem:[%s425 + $0x8] sm:$0xf]
    %v429 = vld [vmem:[%s425 + $0xc] sm:$0xf]
    %v430 = vld [vmem:[%s425 + $0x10] sm:$0xf]
    %v431 = vld [vmem:[%s425 + $0x14] sm:$0xf]
    %v432 = vld [vmem:[%s425 + $0x18] sm:$0xf]
    %v433 = vld [vmem:[%s425 + $0x1c] sm:$0xf]
    %v434 = vld [vmem:[%s425 + $0x20] sm:$0xf]
    %v435 = vld [vmem:[%s425 + $0x24] sm:$0xf]
    %v436 = vld [vmem:[%s425 + $0x28] sm:$0xf]
    %v437 = vld [vmem:[%s425 + $0x2c] sm:$0xf]
    %v438 = vld [vmem:[%s425 + $0x30] sm:$0xf]
    %v439 = vld [vmem:[%s425 + $0x34] sm:$0xf]
    %v440 = vld [vmem:[%s425 + $0x38] sm:$0xf]
    %v441 = vld [vmem:[%s425 + $0x3c] sm:$0xf]
    %v458 = vunpack.c.l.b16 %v426
    %v459 = vunpack.c.l.b16 %v427
    %v460 = vunpack.c.l.b16 %v428
    %v461 = vunpack.c.l.b16 %v429
    %v462 = vunpack.c.l.b16 %v430
    %v463 = vunpack.c.l.b16 %v431
    %v464 = vunpack.c.l.b16 %v432
    %v465 = vunpack.c.l.b16 %v433
    %v466 = vunpack.c.l.b16 %v434
    %v467 = vunpack.c.l.b16 %v435
    %v468 = vunpack.c.l.b16 %v436
    %v469 = vunpack.c.l.b16 %v437
    %v470 = vunpack.c.l.b16 %v438
    %v471 = vunpack.c.l.b16 %v439
    %v472 = vunpack.c.l.b16 %v440
    %v473 = vunpack.c.l.b16 %v441
    %v474 = vpack.c.b16 %v459, %v458
    %v475 = vpack.c.b16 %v461, %v460
    %v476 = vpack.c.b16 %v463, %v462
    %v477 = vpack.c.b16 %v465, %v464
    %v478 = vpack.c.b16 %v467, %v466
    %v479 = vpack.c.b16 %v469, %v468
    %v480 = vpack.c.b16 %v471, %v470
    %v481 = vpack.c.b16 %v473, %v472
    %490 = vmatprep.subr.bf16.mxu0 0
    %491 = vmatpush1.bf16.msra.mxu0 %v481
    %492 = vmatprep.subr.bf16.mxu0 0
    %493 = vmatpush1.bf16.msra.mxu0 %v480
    %494 = vmatprep.subr.bf16.mxu0 0
    %495 = vmatpush1.bf16.msra.mxu0 %v479
    %496 = vmatprep.subr.bf16.mxu0 0
    %497 = vmatpush1.bf16.msra.mxu0 %v478
    %498 = vmatprep.subr.bf16.mxu0 0
    %499 = vmatpush1.bf16.msra.mxu0 %v477
    %500 = vmatprep.subr.bf16.mxu0 0
    %501 = vmatpush1.bf16.msra.mxu0 %v476
    %502 = vmatprep.subr.bf16.mxu0 0
    %503 = vmatpush1.bf16.msra.mxu0 %v475
    %504 = vmatprep.subr.bf16.mxu0 0
    %505 = vmatpush1.bf16.msra.mxu0 %v474
    %506 = vmatprep.subr.bf16.mxu0 0
    %507 = vmatpush2.bf16.msra.mxu0 0
    %508 = vmatprep.subr.bf16.mxu0 0
    %509 = vmatpush2.bf16.msra.mxu0 0
    %510 = vmatprep.subr.bf16.mxu0 0
    %511 = vmatpush2.bf16.msra.mxu0 0
    %512 = vmatprep.subr.bf16.mxu0 0
    %513 = vmatpush2.bf16.msra.mxu0 0
    %514 = vmatprep.subr.bf16.mxu0 0
    %515 = vmatpush2.bf16.msra.mxu0 0
    %516 = vmatprep.subr.bf16.mxu0 0
    %517 = vmatpush2.bf16.msra.mxu0 0
    %518 = vmatprep.subr.bf16.mxu0 0
    %519 = vmatpush2.bf16.msra.mxu0 0
    %520 = vmatprep.subr.bf16.mxu0 0
    %521 = vmatpush2.bf16.msra.mxu0 0
    %522 = vmatprep.mubr.bf16.mxu0 0
    %523 = vmatmul.mubr.bf16.gmra.mxu0 %v100
    %v524 = vpop.f32.mrf.mxu0
    %v525 = vadd.f32 0.0, %v524
    %v526 = vpop.f32.mrf.mxu0
    %v527 = vpop.f32.mrf.mxu0
    %v528 = vadd.f32 0.0, %v527
    %v529 = vpop.f32.mrf.mxu0
    %530 = vdwg.mxu0
    %531 = vset.pattern.permute.xlu0 2
    %532 = vperm.xlu0 %531, %v302
    %v533 = vpop.permute.xlu0 %532
    %v535 = vmul.f32 %v533, %v525
    %v536 = vmul.f32 %v533, %v528
    %v537 = vadd.f32 %v423, %v535
    %v538 = vadd.f32 %v424, %v536
    %s539 = scalar_lea.vmem [#allocation4], 192
    %v540 = vld [vmem:[%s539] sm:$0xf]
    %v541 = vld [vmem:[%s539 + $0x4] sm:$0xf]
    %v542 = vld [vmem:[%s539 + $0x8] sm:$0xf]
    %v543 = vld [vmem:[%s539 + $0xc] sm:$0xf]
    %v544 = vld [vmem:[%s539 + $0x10] sm:$0xf]
    %v545 = vld [vmem:[%s539 + $0x14] sm:$0xf]
    %v546 = vld [vmem:[%s539 + $0x18] sm:$0xf]
    %v547 = vld [vmem:[%s539 + $0x1c] sm:$0xf]
    %v548 = vld [vmem:[%s539 + $0x20] sm:$0xf]
    %v549 = vld [vmem:[%s539 + $0x24] sm:$0xf]
    %v550 = vld [vmem:[%s539 + $0x28] sm:$0xf]
    %v551 = vld [vmem:[%s539 + $0x2c] sm:$0xf]
    %v552 = vld [vmem:[%s539 + $0x30] sm:$0xf]
    %v553 = vld [vmem:[%s539 + $0x34] sm:$0xf]
    %v554 = vld [vmem:[%s539 + $0x38] sm:$0xf]
    %v555 = vld [vmem:[%s539 + $0x3c] sm:$0xf]
    %v572 = vunpack.c.l.b16 %v540
    %v573 = vunpack.c.l.b16 %v541
    %v574 = vunpack.c.l.b16 %v542
    %v575 = vunpack.c.l.b16 %v543
    %v576 = vunpack.c.l.b16 %v544
    %v577 = vunpack.c.l.b16 %v545
    %v578 = vunpack.c.l.b16 %v546
    %v579 = vunpack.c.l.b16 %v547
    %v580 = vunpack.c.l.b16 %v548
    %v581 = vunpack.c.l.b16 %v549
    %v582 = vunpack.c.l.b16 %v550
    %v583 = vunpack.c.l.b16 %v551
    %v584 = vunpack.c.l.b16 %v552
    %v585 = vunpack.c.l.b16 %v553
    %v586 = vunpack.c.l.b16 %v554
    %v587 = vunpack.c.l.b16 %v555
    %v588 = vpack.c.b16 %v573, %v572
    %v589 = vpack.c.b16 %v575, %v574
    %v590 = vpack.c.b16 %v577, %v576
    %v591 = vpack.c.b16 %v579, %v578
    %v592 = vpack.c.b16 %v581, %v580
    %v593 = vpack.c.b16 %v583, %v582
    %v594 = vpack.c.b16 %v585, %v584
    %v595 = vpack.c.b16 %v587, %v586
    %604 = vmatprep.subr.bf16.mxu0 0
    %605 = vmatpush1.bf16.msra.mxu0 %v595
    %606 = vmatprep.subr.bf16.mxu0 0
    %607 = vmatpush1.bf16.msra.mxu0 %v594
    %608 = vmatprep.subr.bf16.mxu0 0
    %609 = vmatpush1.bf16.msra.mxu0 %v593
    %610 = vmatprep.subr.bf16.mxu0 0
    %611 = vmatpush1.bf16.msra.mxu0 %v592
    %612 = vmatprep.subr.bf16.mxu0 0
    %613 = vmatpush1.bf16.msra.mxu0 %v591
    %614 = vmatprep.subr.bf16.mxu0 0
    %615 = vmatpush1.bf16.msra.mxu0 %v590
    %616 = vmatprep.subr.bf16.mxu0 0
    %617 = vmatpush1.bf16.msra.mxu0 %v589
    %618 = vmatprep.subr.bf16.mxu0 0
    %619 = vmatpush1.bf16.msra.mxu0 %v588
    %620 = vmatprep.subr.bf16.mxu0 0
    %621 = vmatpush2.bf16.msra.mxu0 0
    %622 = vmatprep.subr.bf16.mxu0 0
    %623 = vmatpush2.bf16.msra.mxu0 0
    %624 = vmatprep.subr.bf16.mxu0 0
    %625 = vmatpush2.bf16.msra.mxu0 0
    %626 = vmatprep.subr.bf16.mxu0 0
    %627 = vmatpush2.bf16.msra.mxu0 0
    %628 = vmatprep.subr.bf16.mxu0 0
    %629 = vmatpush2.bf16.msra.mxu0 0
    %630 = vmatprep.subr.bf16.mxu0 0
    %631 = vmatpush2.bf16.msra.mxu0 0
    %632 = vmatprep.subr.bf16.mxu0 0
    %633 = vmatpush2.bf16.msra.mxu0 0
    %634 = vmatprep.subr.bf16.mxu0 0
    %635 = vmatpush2.bf16.msra.mxu0 0
    %636 = vmatprep.mubr.bf16.mxu0 0
    %637 = vmatmul.mubr.bf16.gmra.mxu0 %v100
    %v638 = vpop.f32.mrf.mxu0
    %v639 = vadd.f32 0.0, %v638
    %v640 = vpop.f32.mrf.mxu0
    %v641 = vpop.f32.mrf.mxu0
    %v642 = vadd.f32 0.0, %v641
    %v643 = vpop.f32.mrf.mxu0
    %644 = vdwg.mxu0
    %645 = vset.pattern.permute.xlu0 3
    %646 = vperm.xlu0 %645, %v302
    %v647 = vpop.permute.xlu0 %646
    %v649 = vmul.f32 %v647, %v639
    %v650 = vmul.f32 %v647, %v642
    %v651 = vadd.f32 %v537, %v649
    %v652 = vadd.f32 %v538, %v650
    %653 = vst [vmem:[#allocation2] sm:$0xff] %v651
    %654 = vst [vmem:[#allocation2 + $0x8] sm:$0xff] %v652
    // Predicated region
    $region42: #{lambda_forward.1} parent=1 // pred_check
      %p655 = pneg %p57
    $region43: #{lambda_forward.1} parent=1 // pred_check_branch
      %657 = sbr.rel (%p655) target = $region45
    $region44: #{lambda_forward.1} parent=1 // pred_region
      %v658 = vld [vmem:[%s6] sm:$0x1]
      %v659 = vld [vmem:[%s5] sm:$0x1]
      %660 = vset.pattern.permute.xlu0 0
      %661 = vperm.xlu0 %660, %v75
      %v662 = vpop.permute.xlu0 %661
      %v664 = vlaneseq
      %v665 = vshrl.u32 %v664, 7
      %v666 = vsub.s32 0, %v665
      %v667 = vrot.slane %v662, %v666
      %v668 = vmul.f32 %v667, %v659
      %v669 = vadd.f32 %v658, %v668
      %s670 = scalar_lea.vmem %s5, 1
      %v671 = vld [vmem:[%s670] sm:$0x1]
      %672 = vset.pattern.permute.xlu0 1
      %673 = vperm.xlu0 %672, %v75
      %v674 = vpop.permute.xlu0 %673
      %v676 = vlaneseq
      %v677 = vshrl.u32 %v676, 7
      %v678 = vsub.s32 0, %v677
      %v679 = vrot.slane %v674, %v678
      %v680 = vmul.f32 %v679, %v671
      %v681 = vadd.f32 %v669, %v680
      %s682 = scalar_lea.vmem %s5, 2
      %v683 = vld [vmem:[%s682] sm:$0x1]
      %684 = vset.pattern.permute.xlu0 2
      %685 = vperm.xlu0 %684, %v75
      %v686 = vpop.permute.xlu0 %685
      %v688 = vlaneseq
      %v689 = vshrl.u32 %v688, 7
      %v690 = vsub.s32 0, %v689
      %v691 = vrot.slane %v686, %v690
      %v692 = vmul.f32 %v691, %v683
      %v693 = vadd.f32 %v681, %v692
      %s694 = scalar_lea.vmem %s5, 3
      %v695 = vld [vmem:[%s694] sm:$0x1]
      %696 = vset.pattern.permute.xlu0 3
      %697 = vperm.xlu0 %696, %v75
      %v698 = vpop.permute.xlu0 %697
      %v700 = vlaneseq
      %v701 = vshrl.u32 %v700, 7
      %v702 = vsub.s32 0, %v701
      %v703 = vrot.slane %v698, %v702
      %v704 = vmul.f32 %v703, %v695
      %v705 = vadd.f32 %v693, %v704
      %v706 = vld [vmem:[#allocation3] sm:$0x1]
      %v707 = vld [vmem:[#allocation2] sm:$0xff]
      %v708 = vld [vmem:[#allocation2 + $0x8] sm:$0xff]
      %v710 = vlaneseq
      %v711 = vshrl.u32 %v710, 7
      %v712 = vsub.s32 0, %v711
      %v713 = vrot.slane %v705, %v712
      %v715 = vadd.f32 %v707, %v713
      %v716 = vadd.f32 %v708, %v713
      %v718 = vlaneseq
      %v719 = vshrl.u32 %v718, 7
      %v720 = vsub.s32 0, %v719
      %v721 = vrot.slane %v706, %v720
      %722 = vset.pattern.permute.xlu0 0
      %723 = vperm.xlu0 %722, %v721
      %v724 = vpop.permute.xlu0 %723
      %v726 = vmul.f32 %v724, %v715
      %v727 = vmul.f32 %v724, %v716
      %728 = vst [vmem:[%s7] sm:$0xff] %v726
      %729 = vst [vmem:[%s7 + $0x8] sm:$0xff] %v727
    $region45: #{lambda_forward.1} parent=1 // pred_fallthru
      _
    // Predicated region
    $region46: #{lambda_forward.1} parent=1 // pred_check
      _
    $region47: #{lambda_forward.1} parent=1 // pred_check_branch
      %731 = sbr.rel (0) target = $region49
    $region48: #{lambda_forward.1} parent=1 // pred_region
      _
    $region49: #{lambda_forward.1} parent=1 // pred_fallthru
      _
    // Predicated region
    $region50: #{lambda_forward.1} parent=1 // pred_check
      _
    $region51: #{lambda_forward.1} parent=1 // pred_check_branch
      %733 = sbr.rel (0) target = $region53
    $region52: #{lambda_forward.1} parent=1 // pred_region
      _
    $region53: #{lambda_forward.1} parent=1 // pred_fallthru
      _
    %734 = vsyncpa [#allocation5], 1
    %735 = vsyncpa [#allocation7], 1

</llo_original>
